<compile_context>
chip_gen: v6e
topology: v6e:2x2x1
jax: 0.10.0
libtpu: 0.0.40
codegen_flags: <defaults>
</compile_context>

<pallas_src>
import functools
import math

import numpy as np

import jax
import jax.numpy as jnp
from jax.experimental import pallas as pl
from jax.experimental.pallas import tpu as pltpu


# Combined (output tile + lane-padded pos tile) target bytes per pipeline buffer.
_TARGET_TILE_BYTES = 6 << 20


def _cdiv(a, b):
    return -(-a // b)


def _round_up(a, b):
    return _cdiv(a, b) * b


def _axial_rope_kernel(pos_ref, g_ref, out_ref, *, use_mxu):
    # pos_ref: (rows, 2k)  interleaved [h0, w0, h1, w1, ...] per output row
    # g_ref:   (2k, L)     row 2j   = Gh at lanes [j*F,(j+1)*F), zeros elsewhere
    #                      row 2j+1 = Gw at lanes [j*F,(j+1)*F), zeros elsewhere
    # out_ref: (rows, L)   lane-dense; single unmasked full-width store per tile
    phw = pos_ref[...].astype(jnp.float32)
    g = g_ref[...]  # already float32
    if use_mxu:
        # Tiny-K matmul: broadcast + reduce happen on the MXU (vector-extended
        # slot), leaving VALU/XLU and the store port free on this write-bound
        # kernel.  f32 accumulation.
        acc = jnp.dot(phw, g, preferred_element_type=jnp.float32)
    else:
        # k == 1: just two independent products, summed once (no serial chain).
        acc = phw[:, 0:1] * g[0:1, :] + phw[:, 1:2] * g[1:2, :]
    out_ref[...] = acc.astype(out_ref.dtype)


def make_axial_rope_freqs(dim, n_heads, dtype=jnp.float32):
    """Deterministic parameter init matching the PyTorch __init__ (host-side f64)."""
    log_min = math.log(math.pi)
    log_max = math.log(10.0 * math.pi)
    n = n_heads * dim // 4 + 1
    freqs = np.exp(np.linspace(log_min, log_max, n, dtype=np.float64)[:-1])
    freqs = freqs.reshape(dim // 4, n_heads).T  # (n_heads, dim//4)
    return jnp.asarray(freqs, dtype=dtype)


def axial_rope_forward(pos, freqs, *, out_dtype=None, max_rows_per_tile=16384):
    """pos: (..., 2) -> (..., n_heads, dim//2) via a lane-dense Pallas kernel."""
    n_heads, dim4 = freqs.shape
    dim_half = 2 * dim4
    F = n_heads * dim_half                    # flattened features per position
    lead_shape = pos.shape[:-1]
    N = math.prod(lead_shape) if lead_shape else 1
    if out_dtype is None:
        out_dtype = pos.dtype

    # Lane-fold factor: fold k consecutive positions into one output row so the
    # lane width L = k*F is a multiple of 128 -> unmasked full-width stores.
    k = 128 // math.gcd(F, 128)
    if k > 16:
        k = 1  # rare F: correct but stores are partially masked
    L = k * F
    use_mxu = k >= 2

    # ---- masked frequency table (concat folded into the table), float32 ------
    f32 = freqs.astype(jnp.float32)
    zf = jnp.zeros_like(f32)
    gh = jnp.concatenate([f32, zf], axis=-1).reshape(1, F)   # per-head [f, 0]
    gw = jnp.concatenate([zf, f32], axis=-1).reshape(1, F)   # per-head [0, f]
    rows_g = []
    for j in range(k):
        left = jnp.zeros((1, j * F), jnp.float32)
        right = jnp.zeros((1, (k - 1 - j) * F), jnp.float32)
        rows_g.append(jnp.concatenate([left, gh, right], axis=-1))
        rows_g.append(jnp.concatenate([left, gw, right], axis=-1))
    g2 = jnp.concatenate(rows_g, axis=0)                      # (2k, L) float32

    # ---- positions as an interleaved (Nr, 2k) slab (pure reshape) ------------
    pos_flat = pos.reshape(N, 2)
    pad_rows = (-N) % k
    if pad_rows:
        # Rare ragged case (N not a multiple of k): tiny pos pad + one output
        # slice copy at the end.  Common shapes take the zero-copy path below.
        pos_flat = jnp.concatenate(
            [pos_flat, jnp.zeros((pad_rows, 2), pos_flat.dtype)], axis=0)
    Np = N + pad_rows
    Nr = Np // k
    phw = pos_flat.reshape(Nr, 2 * k)         # [h0, w0, h1, w1, ...] per row

    # ---- tile / grid sizing ---------------------------------------------------
    out_isz = jnp.dtype(out_dtype).itemsize
    pos_isz = jnp.dtype(pos.dtype).itemsize
    # Effective VMEM per output row per buffer: output row + pos row lane-padded
    # to 128 lanes (the (rows, 2k) block pads to 128 lanes in VMEM).
    bytes_per_row = L * out_isz + 128 * pos_isz
    rows_cap = max(8, min(int(max_rows_per_tile),
                          (_TARGET_TILE_BYTES // bytes_per_row) // 8 * 8))
    if Nr <= rows_cap:
        rows = Nr            # full-extent block (allowed even if not 8-aligned)
        grid = 1
    else:
        # Even step count keeps v7x's two TensorCores balanced; on 1-TC chips it
        # is neutral.  Final block may be partial; Pallas masks its writeback.
        steps = 2 * _cdiv(Nr, 2 * rows_cap)
        rows = _round_up(_cdiv(Nr, steps), 8)
        grid = _cdiv(Nr, rows)

    # vmem limit from actual footprints: 2x out tile + 2x lane-padded pos tile +
    # the (small) freq table, plus headroom for Mosaic scratch.
    g2_bytes = _round_up(2 * k, 8) * _round_up(L, 128) * 4
    vmem_bytes = (2 * rows * L * out_isz
                  + 2 * rows * 128 * pos_isz
                  + 2 * g2_bytes)
    vmem_bytes = min(max(int(1.25 * vmem_bytes) + (2 << 20), 4 << 20), 64 << 20)

    out_flat = pl.pallas_call(
        functools.partial(_axial_rope_kernel, use_mxu=use_mxu),
        out_shape=jax.ShapeDtypeStruct((Nr, L), out_dtype),
        grid_spec=pltpu.PrefetchScalarGridSpec(
            num_scalar_prefetch=0,
            grid=(grid,),
            in_specs=[
                pl.BlockSpec((rows, 2 * k), lambda i: (i, 0)),
                pl.BlockSpec((2 * k, L), lambda i: (0, 0)),
            ],
            out_specs=pl.BlockSpec((rows, L), lambda i: (i, 0)),
        ),
        compiler_params=pltpu.CompilerParams(
            dimension_semantics=("parallel",),
            vmem_limit_bytes=vmem_bytes,
        ),
    )(phw, g2)

    out = out_flat.reshape(Np, F)
    if pad_rows:
        out = out[:N]        # only in the rare N % k != 0 case
    return out.reshape(*lead_shape, n_heads, dim_half)


def axial_rope_reference(pos, freqs):
    """Pure-JAX reference mirroring the PyTorch forward."""
    f = freqs.astype(pos.dtype)
    theta_h = pos[..., None, 0:1] * f
    theta_w = pos[..., None, 1:2] * f
    return jnp.concatenate([theta_h, theta_w], axis=-1)


if __name__ == "__main__":
    key = jax.random.PRNGKey(0)
    k1, k2, k3, k4 = jax.random.split(key, 4)

    # Case 1: dim=32, n_heads=4 -> F=64, k=2 (MXU path), single tile, grid=1.
    dim, n_heads = 32, 4
    freqs = make_axial_rope_freqs(dim, n_heads)          # (4, 8)
    pos = jax.random.normal(k1, (2, 16, 16, 2), dtype=jnp.float32)
    out = jax.block_until_ready(axial_rope_forward(pos, freqs))
    ref = axial_rope_reference(pos, freqs)
    assert out.shape == (2, 16, 16, n_heads, dim // 2), out.shape
    assert out.dtype == pos.dtype
    assert jnp.allclose(out, ref, atol=1e-5, rtol=1e-5), "case 1 mismatch"

    # Case 2: dim=32, n_heads=8 -> F=128, k=1 (VPU path), full-extent 36-row block.
    dim2, n_heads2 = 32, 8
    freqs2 = make_axial_rope_freqs(dim2, n_heads2)       # (8, 8)
    pos2 = jax.random.normal(k2, (4, 9, 2), dtype=jnp.float32)
    out2 = jax.block_until_ready(axial_rope_forward(pos2, freqs2))
    ref2 = axial_rope_reference(pos2, freqs2)
    assert out2.shape == (4, 9, n_heads2, dim2 // 2), out2.shape
    assert jnp.allclose(out2, ref2, atol=1e-5, rtol=1e-5), "case 2 mismatch"

    # Case 3: ragged multi-step grid (partial final block, no output slice copy).
    pos3 = jax.random.normal(k3, (2, 15, 16, 2), dtype=jnp.float32)
    out3 = jax.block_until_ready(
        axial_rope_forward(pos3, freqs, max_rows_per_tile=64))
    ref3 = axial_rope_reference(pos3, freqs)
    assert jnp.allclose(out3, ref3, atol=1e-5, rtol=1e-5), "case 3 mismatch"

    # Case 4: N % k != 0 fallback (tiny pos pad + output slice).
    pos4 = jax.random.normal(k4, (3, 5, 2), dtype=jnp.float32)
    out4 = jax.block_until_ready(axial_rope_forward(pos4, freqs))
    ref4 = axial_rope_reference(pos4, freqs)
    assert jnp.allclose(out4, ref4, atol=1e-5, rtol=1e-5), "case 4 mismatch"

    print("KERNEL_OK")
</pallas_src>

<mosaic_0001>
module attributes {stable_mosaic.version = 11 : i64} {
  func.func @_axial_rope_kernel(%arg0: i32, %arg1: memref<256x4xf32, #tpu.memory_space<vmem>>, %arg2: memref<4x128xf32, #tpu.memory_space<vmem>>, %arg3: memref<256x128xf32, #tpu.memory_space<vmem>>) attributes {dimension_semantics = [#tpu.dimension_semantics<parallel>], iteration_bounds = array<i64: 1>, scalar_prefetch = 0 : i64, scratch_operands = 0 : i64, tpu.core_type = #tpu.core_type<tc>, window_params = [{transform_indices = @transform_0, window_bounds = array<i64: 256, 4>}, {pipeline_mode = #tpu.pipeline_mode<synchronous>, transform_indices = @transform_1, window_bounds = array<i64: 4, 128>}, {transform_indices = @transform_2, window_bounds = array<i64: 256, 128>}]} {
    %c0 = arith.constant 0 : index
    %c0_0 = arith.constant 0 : index
    %0 = vector.load %arg1[%c0, %c0_0] : memref<256x4xf32, #tpu.memory_space<vmem>>, vector<256x4xf32>
    %c0_1 = arith.constant 0 : index
    %c0_2 = arith.constant 0 : index
    %1 = vector.load %arg2[%c0_1, %c0_2] : memref<4x128xf32, #tpu.memory_space<vmem>>, vector<4x128xf32>
    %cst = arith.constant dense<0.000000e+00> : vector<256x128xf32>
    %2 = tpu.matmul %0, %1, %cst {dimension_numbers = #tpu.dot_dimension_numbers<[1], [0], [0], [1], [0, 0, 1, 1], [], []>} : vector<256x4xf32>, vector<4x128xf32>, vector<256x128xf32> -> vector<256x128xf32>
    %c0_3 = arith.constant 0 : index
    %c0_4 = arith.constant 0 : index
    %3 = vector.load %arg3[%c0_3, %c0_4] : memref<256x128xf32, #tpu.memory_space<vmem>>, vector<256x128xf32>
    tpu.vector_store %arg3[%c0_3, %c0_4], %2 {strides = array<i32>} : memref<256x128xf32, #tpu.memory_space<vmem>>, vector<256x128xf32>,
    return
  }
  func.func @transform_0(%arg0: i32) -> (i32, i32) {
    %c0_i32 = arith.constant 0 : i32
    %c0_i32_0 = arith.constant 0 : i32
    return %arg0, %c0_i32 : i32, i32
  }
  func.func @transform_1(%arg0: i32) -> (i32, i32) {
    %c0_i32 = arith.constant 0 : i32
    %c0_i32_0 = arith.constant 0 : i32
    %c0_i32_1 = arith.constant 0 : i32
    return %c0_i32, %c0_i32_0 : i32, i32
  }
  func.func @transform_2(%arg0: i32) -> (i32, i32) {
    %c0_i32 = arith.constant 0 : i32
    %c0_i32_0 = arith.constant 0 : i32
    return %arg0, %c0_i32 : i32, i32
  }
}

</mosaic_0001>

<llo_original>
// kernel: tpu_custom_call.1
$region0: #{tpu_custom_call.1}
  #allocation0 [shape = 'u32[]', space=smem, size = 0x4, offset = 0x4, fixed_abs, tag = 'smem constant byte address 0x4 - core index']
  #allocation1 [shape = 'u32[144,128]{1,0:T(1,128)}', space=vmem, size = 0x12000, scoped, tag = 'internal scratch']
  %s0 = inlined_call_operand.vmem [shape: f32[256,4], index: 0, kind: input, shape index: {}]
  %s1 = inlined_call_operand.vmem [shape: f32[4,128], index: 1, kind: input, shape index: {}]
  %s2 = inlined_call_operand.hbm [shape: f32[256,128], index: 2, kind: output, shape index: {}]
  %s3 = sld [smem:[#allocation0]]
  $region18: #{tpu_custom_call.1} parent=0
    _
  %s5 = ssub.s32 1, %s3
  %s6 = scalar_select 0, %s5, %s3
  $region1: #{tpu_custom_call.1} parent=0
    #allocation2 [shape = 'u8[131072]{0}', space=vmem, size = 0x20000, scoped, tag = 'output window, operand 0, single buffered']
    #allocation3 [shape = 's32[1]{0}', space=sflag, size = 0x4, scoped, tag = 'scoped memory for tpu_custom_call.1']
    %7 = vsyncpa [#allocation3], 0
    // Predicated region
    $region2: #{tpu_custom_call.1} parent=1 // pred_check
      _
    $region3: #{tpu_custom_call.1} parent=1 // pred_check_branch
      %9 = sbr.rel (0) target = $region5
    $region4: #{tpu_custom_call.1} parent=1 // pred_region
      _
    $region5: #{tpu_custom_call.1} parent=1 // pred_fallthru
      _
    // Predicated region
    $region6: #{tpu_custom_call.1} parent=1 // pred_check
      _
    $region7: #{tpu_custom_call.1} parent=1 // pred_check_branch
      %11 = sbr.rel (0) target = $region9
    $region8: #{tpu_custom_call.1} parent=1 // pred_region
      _
    $region9: #{tpu_custom_call.1} parent=1 // pred_fallthru
      _
    %v12 = vld [vmem:[%s0] sm:$0xff]
    %v13 = vld [vmem:[%s0 + $0x8] sm:$0xff]
    %v14 = vld [vmem:[%s0 + $0x10] sm:$0xff]
    %v15 = vld [vmem:[%s0 + $0x18] sm:$0xff]
    %v16 = vld [vmem:[%s0 + $0x20] sm:$0xff]
    %v17 = vld [vmem:[%s0 + $0x28] sm:$0xff]
    %v18 = vld [vmem:[%s0 + $0x30] sm:$0xff]
    %v19 = vld [vmem:[%s0 + $0x38] sm:$0xff]
    %v20 = vld [vmem:[%s0 + $0x40] sm:$0xff]
    %v21 = vld [vmem:[%s0 + $0x48] sm:$0xff]
    %v22 = vld [vmem:[%s0 + $0x50] sm:$0xff]
    %v23 = vld [vmem:[%s0 + $0x58] sm:$0xff]
    %v24 = vld [vmem:[%s0 + $0x60] sm:$0xff]
    %v25 = vld [vmem:[%s0 + $0x68] sm:$0xff]
    %v26 = vld [vmem:[%s0 + $0x70] sm:$0xff]
    %v27 = vld [vmem:[%s0 + $0x78] sm:$0xff]
    %v28 = vld [vmem:[%s0 + $0x80] sm:$0xff]
    %v29 = vld [vmem:[%s0 + $0x88] sm:$0xff]
    %v30 = vld [vmem:[%s0 + $0x90] sm:$0xff]
    %v31 = vld [vmem:[%s0 + $0x98] sm:$0xff]
    %v32 = vld [vmem:[%s0 + $0xa0] sm:$0xff]
    %v33 = vld [vmem:[%s0 + $0xa8] sm:$0xff]
    %v34 = vld [vmem:[%s0 + $0xb0] sm:$0xff]
    %v35 = vld [vmem:[%s0 + $0xb8] sm:$0xff]
    %v36 = vld [vmem:[%s0 + $0xc0] sm:$0xff]
    %v37 = vld [vmem:[%s0 + $0xc8] sm:$0xff]
    %v38 = vld [vmem:[%s0 + $0xd0] sm:$0xff]
    %v39 = vld [vmem:[%s0 + $0xd8] sm:$0xff]
    %v40 = vld [vmem:[%s0 + $0xe0] sm:$0xff]
    %v41 = vld [vmem:[%s0 + $0xe8] sm:$0xff]
    %v42 = vld [vmem:[%s0 + $0xf0] sm:$0xff]
    %v43 = vld [vmem:[%s0 + $0xf8] sm:$0xff]
    %v44 = vld [vmem:[%s1] sm:$0xf]
    %vm45 = vcmask 31744
    %v47 = vsel %vm45, %v12, 0
    %v50 = vsel %vm45, %v13, 0
    %v53 = vsel %vm45, %v14, 0
    %v56 = vsel %vm45, %v15, 0
    %v59 = vsel %vm45, %v16, 0
    %v62 = vsel %vm45, %v17, 0
    %v65 = vsel %vm45, %v18, 0
    %v68 = vsel %vm45, %v19, 0
    %v71 = vsel %vm45, %v20, 0
    %v74 = vsel %vm45, %v21, 0
    %v77 = vsel %vm45, %v22, 0
    %v80 = vsel %vm45, %v23, 0
    %v83 = vsel %vm45, %v24, 0
    %v86 = vsel %vm45, %v25, 0
    %v89 = vsel %vm45, %v26, 0
    %v92 = vsel %vm45, %v27, 0
    %v95 = vsel %vm45, %v28, 0
    %v98 = vsel %vm45, %v29, 0
    %v101 = vsel %vm45, %v30, 0
    %v104 = vsel %vm45, %v31, 0
    %v107 = vsel %vm45, %v32, 0
    %v110 = vsel %vm45, %v33, 0
    %v113 = vsel %vm45, %v34, 0
    %v116 = vsel %vm45, %v35, 0
    %v119 = vsel %vm45, %v36, 0
    %v122 = vsel %vm45, %v37, 0
    %v125 = vsel %vm45, %v38, 0
    %v128 = vsel %vm45, %v39, 0
    %v131 = vsel %vm45, %v40, 0
    %v134 = vsel %vm45, %v41, 0
    %v137 = vsel %vm45, %v42, 0
    %v140 = vsel %vm45, %v43, 0
    %vm142 = vcmask 1043456
    %v144 = vsel %vm142, %v44, 0
    %146 = vmatprep.subr.mxu0 0.0
    %147 = vmatpush1.msra.mxu0 0.0
    %148 = vmatprep.subr.mxu0 0.0
    %149 = vmatpush1.msra.mxu0 0.0
    %150 = vmatprep.subr.mxu0 0.0
    %151 = vmatpush1.msra.mxu0 0.0
    %152 = vmatprep.subr.mxu0 0.0
    %153 = vmatpush1.msra.mxu0 0.0
    %154 = vmatprep.subr.mxu0 0.0
    %155 = vmatpush1.msra.mxu0 0.0
    %156 = vmatprep.subr.mxu0 0.0
    %157 = vmatpush1.msra.mxu0 0.0
    %158 = vmatprep.subr.mxu0 0.0
    %159 = vmatpush1.msra.mxu0 0.0
    %160 = vmatprep.subr.mxu0 0.0
    %161 = vmatpush1.msra.mxu0 0.0
    %162 = vmatprep.subr.mxu0 0.0
    %163 = vmatpush1.msra.mxu0 0.0
    %164 = vmatprep.subr.mxu0 0.0
    %165 = vmatpush1.msra.mxu0 0.0
    %166 = vmatprep.subr.mxu0 0.0
    %167 = vmatpush1.msra.mxu0 0.0
    %168 = vmatprep.subr.mxu0 0.0
    %169 = vmatpush1.msra.mxu0 0.0
    %170 = vmatprep.subr.mxu0 0.0
    %171 = vmatpush1.msra.mxu0 0.0
    %172 = vmatprep.subr.mxu0 0.0
    %173 = vmatpush1.msra.mxu0 0.0
    %174 = vmatprep.subr.mxu0 0.0
    %175 = vmatpush1.msra.mxu0 0.0
    %176 = vmatprep.subr.mxu0 0.0
    %177 = vmatpush1.msra.mxu0 %v144
    %178 = vmatprep.subr.mxu0 0.0
    %179 = vmatpush2.msra.mxu0 0.0
    %180 = vmatprep.subr.mxu0 0.0
    %181 = vmatpush2.msra.mxu0 0.0
    %182 = vmatprep.subr.mxu0 0.0
    %183 = vmatpush2.msra.mxu0 0.0
    %184 = vmatprep.subr.mxu0 0.0
    %185 = vmatpush2.msra.mxu0 0.0
    %186 = vmatprep.subr.mxu0 0.0
    %187 = vmatpush2.msra.mxu0 0.0
    %188 = vmatprep.subr.mxu0 0.0
    %189 = vmatpush2.msra.mxu0 0.0
    %190 = vmatprep.subr.mxu0 0.0
    %191 = vmatpush2.msra.mxu0 0.0
    %192 = vmatprep.subr.mxu0 0.0
    %193 = vmatpush2.msra.mxu0 0.0
    %194 = vmatprep.subr.mxu0 0.0
    %195 = vmatpush2.msra.mxu0 0.0
    %196 = vmatprep.subr.mxu0 0.0
    %197 = vmatpush2.msra.mxu0 0.0
    %198 = vmatprep.subr.mxu0 0.0
    %199 = vmatpush2.msra.mxu0 0.0
    %200 = vmatprep.subr.mxu0 0.0
    %201 = vmatpush2.msra.mxu0 0.0
    %202 = vmatprep.subr.mxu0 0.0
    %203 = vmatpush2.msra.mxu0 0.0
    %204 = vmatprep.subr.mxu0 0.0
    %205 = vmatpush2.msra.mxu0 0.0
    %206 = vmatprep.subr.mxu0 0.0
    %207 = vmatpush2.msra.mxu0 0.0
    %208 = vmatprep.subr.mxu0 0.0
    %209 = vmatpush2.msra.mxu0 0.0
    %210 = vmatprep.mubr.f32.mxu0 0.0
    %211 = vmatmul.mubr.f32.gmra.mxu0 %v47
    %v212 = vpop.f32.mrf.mxu0
    %v213 = vadd.f32 0.0, %v212
    %v214 = vpop.f32.mrf.mxu0
    %215 = vmatprep.mubr.f32.mxu0 0.0
    %216 = vmatmul.mubr.f32.gmra.mxu0 %v50
    %v217 = vpop.f32.mrf.mxu0
    %v218 = vadd.f32 0.0, %v217
    %v219 = vpop.f32.mrf.mxu0
    %220 = vmatprep.mubr.f32.mxu0 0.0
    %221 = vmatmul.mubr.f32.gmra.mxu0 %v53
    %v222 = vpop.f32.mrf.mxu0
    %v223 = vadd.f32 0.0, %v222
    %v224 = vpop.f32.mrf.mxu0
    %225 = vmatprep.mubr.f32.mxu0 0.0
    %226 = vmatmul.mubr.f32.gmra.mxu0 %v56
    %v227 = vpop.f32.mrf.mxu0
    %v228 = vadd.f32 0.0, %v227
    %v229 = vpop.f32.mrf.mxu0
    %230 = vmatprep.mubr.f32.mxu0 0.0
    %231 = vmatmul.mubr.f32.gmra.mxu0 %v59
    %v232 = vpop.f32.mrf.mxu0
    %v233 = vadd.f32 0.0, %v232
    %v234 = vpop.f32.mrf.mxu0
    %235 = vmatprep.mubr.f32.mxu0 0.0
    %236 = vmatmul.mubr.f32.gmra.mxu0 %v62
    %v237 = vpop.f32.mrf.mxu0
    %v238 = vadd.f32 0.0, %v237
    %v239 = vpop.f32.mrf.mxu0
    %240 = vmatprep.mubr.f32.mxu0 0.0
    %241 = vmatmul.mubr.f32.gmra.mxu0 %v65
    %v242 = vpop.f32.mrf.mxu0
    %v243 = vadd.f32 0.0, %v242
    %v244 = vpop.f32.mrf.mxu0
    %245 = vmatprep.mubr.f32.mxu0 0.0
    %246 = vmatmul.mubr.f32.gmra.mxu0 %v68
    %v247 = vpop.f32.mrf.mxu0
    %v248 = vadd.f32 0.0, %v247
    %v249 = vpop.f32.mrf.mxu0
    %250 = vmatprep.mubr.f32.mxu0 0.0
    %251 = vmatmul.mubr.f32.gmra.mxu0 %v71
    %v252 = vpop.f32.mrf.mxu0
    %v253 = vadd.f32 0.0, %v252
    %v254 = vpop.f32.mrf.mxu0
    %255 = vmatprep.mubr.f32.mxu0 0.0
    %256 = vmatmul.mubr.f32.gmra.mxu0 %v74
    %v257 = vpop.f32.mrf.mxu0
    %v258 = vadd.f32 0.0, %v257
    %v259 = vpop.f32.mrf.mxu0
    %260 = vmatprep.mubr.f32.mxu0 0.0
    %261 = vmatmul.mubr.f32.gmra.mxu0 %v77
    %v262 = vpop.f32.mrf.mxu0
    %v263 = vadd.f32 0.0, %v262
    %v264 = vpop.f32.mrf.mxu0
    %265 = vmatprep.mubr.f32.mxu0 0.0
    %266 = vmatmul.mubr.f32.gmra.mxu0 %v80
    %v267 = vpop.f32.mrf.mxu0
    %v268 = vadd.f32 0.0, %v267
    %v269 = vpop.f32.mrf.mxu0
    %270 = vmatprep.mubr.f32.mxu0 0.0
    %271 = vmatmul.mubr.f32.gmra.mxu0 %v83
    %v272 = vpop.f32.mrf.mxu0
    %v273 = vadd.f32 0.0, %v272
    %v274 = vpop.f32.mrf.mxu0
    %275 = vmatprep.mubr.f32.mxu0 0.0
    %276 = vmatmul.mubr.f32.gmra.mxu0 %v86
    %v277 = vpop.f32.mrf.mxu0
    %v278 = vadd.f32 0.0, %v277
    %v279 = vpop.f32.mrf.mxu0
    %280 = vmatprep.mubr.f32.mxu0 0.0
    %281 = vmatmul.mubr.f32.gmra.mxu0 %v89
    %v282 = vpop.f32.mrf.mxu0
    %v283 = vadd.f32 0.0, %v282
    %v284 = vpop.f32.mrf.mxu0
    %285 = vmatprep.mubr.f32.mxu0 0.0
    %286 = vmatmul.mubr.f32.gmra.mxu0 %v92
    %v287 = vpop.f32.mrf.mxu0
    %v288 = vadd.f32 0.0, %v287
    %v289 = vpop.f32.mrf.mxu0
    %290 = vmatprep.mubr.f32.mxu0 0.0
    %291 = vmatmul.mubr.f32.gmra.mxu0 %v95
    %v292 = vpop.f32.mrf.mxu0
    %v293 = vadd.f32 0.0, %v292
    %v294 = vpop.f32.mrf.mxu0
    %295 = vmatprep.mubr.f32.mxu0 0.0
    %296 = vmatmul.mubr.f32.gmra.mxu0 %v98
    %v297 = vpop.f32.mrf.mxu0
    %v298 = vadd.f32 0.0, %v297
    %v299 = vpop.f32.mrf.mxu0
    %300 = vmatprep.mubr.f32.mxu0 0.0
    %301 = vmatmul.mubr.f32.gmra.mxu0 %v101
    %v302 = vpop.f32.mrf.mxu0
    %v303 = vadd.f32 0.0, %v302
    %v304 = vpop.f32.mrf.mxu0
    %305 = vmatprep.mubr.f32.mxu0 0.0
    %306 = vmatmul.mubr.f32.gmra.mxu0 %v104
    %v307 = vpop.f32.mrf.mxu0
    %v308 = vadd.f32 0.0, %v307
    %v309 = vpop.f32.mrf.mxu0
    %310 = vmatprep.mubr.f32.mxu0 0.0
    %311 = vmatmul.mubr.f32.gmra.mxu0 %v107
    %v312 = vpop.f32.mrf.mxu0
    %v313 = vadd.f32 0.0, %v312
    %v314 = vpop.f32.mrf.mxu0
    %315 = vmatprep.mubr.f32.mxu0 0.0
    %316 = vmatmul.mubr.f32.gmra.mxu0 %v110
    %v317 = vpop.f32.mrf.mxu0
    %v318 = vadd.f32 0.0, %v317
    %v319 = vpop.f32.mrf.mxu0
    %320 = vmatprep.mubr.f32.mxu0 0.0
    %321 = vmatmul.mubr.f32.gmra.mxu0 %v113
    %v322 = vpop.f32.mrf.mxu0
    %v323 = vadd.f32 0.0, %v322
    %v324 = vpop.f32.mrf.mxu0
    %325 = vmatprep.mubr.f32.mxu0 0.0
    %326 = vmatmul.mubr.f32.gmra.mxu0 %v116
    %v327 = vpop.f32.mrf.mxu0
    %v328 = vadd.f32 0.0, %v327
    %v329 = vpop.f32.mrf.mxu0
    %330 = vmatprep.mubr.f32.mxu0 0.0
    %331 = vmatmul.mubr.f32.gmra.mxu0 %v119
    %v332 = vpop.f32.mrf.mxu0
    %v333 = vadd.f32 0.0, %v332
    %v334 = vpop.f32.mrf.mxu0
    %335 = vmatprep.mubr.f32.mxu0 0.0
    %336 = vmatmul.mubr.f32.gmra.mxu0 %v122
    %v337 = vpop.f32.mrf.mxu0
    %v338 = vadd.f32 0.0, %v337
    %v339 = vpop.f32.mrf.mxu0
    %340 = vmatprep.mubr.f32.mxu0 0.0
    %341 = vmatmul.mubr.f32.gmra.mxu0 %v125
    %v342 = vpop.f32.mrf.mxu0
    %v343 = vadd.f32 0.0, %v342
    %v344 = vpop.f32.mrf.mxu0
    %345 = vmatprep.mubr.f32.mxu0 0.0
    %346 = vmatmul.mubr.f32.gmra.mxu0 %v128
    %v347 = vpop.f32.mrf.mxu0
    %v348 = vadd.f32 0.0, %v347
    %v349 = vpop.f32.mrf.mxu0
    %350 = vmatprep.mubr.f32.mxu0 0.0
    %351 = vmatmul.mubr.f32.gmra.mxu0 %v131
    %v352 = vpop.f32.mrf.mxu0
    %v353 = vadd.f32 0.0, %v352
    %v354 = vpop.f32.mrf.mxu0
    %355 = vmatprep.mubr.f32.mxu0 0.0
    %356 = vmatmul.mubr.f32.gmra.mxu0 %v134
    %v357 = vpop.f32.mrf.mxu0
    %v358 = vadd.f32 0.0, %v357
    %v359 = vpop.f32.mrf.mxu0
    %360 = vmatprep.mubr.f32.mxu0 0.0
    %361 = vmatmul.mubr.f32.gmra.mxu0 %v137
    %v362 = vpop.f32.mrf.mxu0
    %v363 = vadd.f32 0.0, %v362
    %v364 = vpop.f32.mrf.mxu0
    %365 = vmatprep.mubr.f32.mxu0 0.0
    %366 = vmatmul.mubr.f32.gmra.mxu0 %v140
    %v367 = vpop.f32.mrf.mxu0
    %v368 = vadd.f32 0.0, %v367
    %v369 = vpop.f32.mrf.mxu0
    %370 = vdwg.mxu0
    %371 = vst [vmem:[#allocation2] sm:$0xff] %v213
    %372 = vst [vmem:[#allocation2 + $0x8] sm:$0xff] %v218
    %373 = vst [vmem:[#allocation2 + $0x10] sm:$0xff] %v223
    %374 = vst [vmem:[#allocation2 + $0x18] sm:$0xff] %v228
    %375 = vst [vmem:[#allocation2 + $0x20] sm:$0xff] %v233
    %376 = vst [vmem:[#allocation2 + $0x28] sm:$0xff] %v238
    %377 = vst [vmem:[#allocation2 + $0x30] sm:$0xff] %v243
    %378 = vst [vmem:[#allocation2 + $0x38] sm:$0xff] %v248
    %379 = vst [vmem:[#allocation2 + $0x40] sm:$0xff] %v253
    %380 = vst [vmem:[#allocation2 + $0x48] sm:$0xff] %v258
    %381 = vst [vmem:[#allocation2 + $0x50] sm:$0xff] %v263
    %382 = vst [vmem:[#allocation2 + $0x58] sm:$0xff] %v268
    %383 = vst [vmem:[#allocation2 + $0x60] sm:$0xff] %v273
    %384 = vst [vmem:[#allocation2 + $0x68] sm:$0xff] %v278
    %385 = vst [vmem:[#allocation2 + $0x70] sm:$0xff] %v283
    %386 = vst [vmem:[#allocation2 + $0x78] sm:$0xff] %v288
    %387 = vst [vmem:[#allocation2 + $0x80] sm:$0xff] %v293
    %388 = vst [vmem:[#allocation2 + $0x88] sm:$0xff] %v298
    %389 = vst [vmem:[#allocation2 + $0x90] sm:$0xff] %v303
    %390 = vst [vmem:[#allocation2 + $0x98] sm:$0xff] %v308
    %391 = vst [vmem:[#allocation2 + $0xa0] sm:$0xff] %v313
    %392 = vst [vmem:[#allocation2 + $0xa8] sm:$0xff] %v318
    %393 = vst [vmem:[#allocation2 + $0xb0] sm:$0xff] %v323
    %394 = vst [vmem:[#allocation2 + $0xb8] sm:$0xff] %v328
    %395 = vst [vmem:[#allocation2 + $0xc0] sm:$0xff] %v333
    %396 = vst [vmem:[#allocation2 + $0xc8] sm:$0xff] %v338
    %397 = vst [vmem:[#allocation2 + $0xd0] sm:$0xff] %v343
    %398 = vst [vmem:[#allocation2 + $0xd8] sm:$0xff] %v348
    %399 = vst [vmem:[#allocation2 + $0xe0] sm:$0xff] %v353
    %400 = vst [vmem:[#allocation2 + $0xe8] sm:$0xff] %v358
    %401 = vst [vmem:[#allocation2 + $0xf0] sm:$0xff] %v363
    %402 = vst [vmem:[#allocation2 + $0xf8] sm:$0xff] %v368
    // Predicated region
    $region10: #{tpu_custom_call.1} parent=1 // pred_check
      _
    $region11: #{tpu_custom_call.1} parent=1 // pred_check_branch
      %404 = sbr.rel (0) target = $region13
    $region12: #{tpu_custom_call.1} parent=1 // pred_region
      %s406 = ssub.s32 4096, 4096
      %407 = vsyncadd [#allocation3], %s406
      %s408 = sshll.u32 [#allocation2], 4
      %s409 = int_to_ptr.vmem [resolvable:$true] %s408
      %414 = dma.vmem_to_hbm [thread:$0]  %s409, 4096, %s2, [#allocation3], 128, 128, 8
    $region13: #{tpu_custom_call.1} parent=1 // pred_fallthru
      _
    // Predicated region
    $region14: #{tpu_custom_call.1} parent=1 // pred_check
      _
    $region15: #{tpu_custom_call.1} parent=1 // pred_check_branch
      %416 = sbr.rel (0) target = $region17
    $region16: #{tpu_custom_call.1} parent=1 // pred_region
      %417 = dma.done [#allocation3], 4096
    $region17: #{tpu_custom_call.1} parent=1 // pred_fallthru
      _
    %418 = vsyncpa [#allocation3], 1

</llo_original>
